<compile_context>
chip_gen: v7x
topology: tpu7x:2x2x1
jax: 0.10.0
libtpu: 0.0.40
codegen_flags: <defaults>
</compile_context>

<pallas_src>
import math

import jax
import jax.numpy as jnp
from jax import lax
from jax.experimental import pallas as pl
from jax.experimental.pallas import tpu as pltpu


# x:[tm,tk] . w:[tn,tk]  (contract last dims)  -> [tm,tn]
_CONTRACT = (((1,), (1,)), ((), ()))

_VMEM_BUDGET = 24 * 1024 * 1024     # keep well inside v7x's 32 MiB scoped / 64 MiB physical
_VMEM_LIMIT_BYTES = 32 * 1024 * 1024
_SMALL_K = 1024                     # collapse the K reduction axis at/below this


def _linear_kernel_fused(x_ref, w_ref, b_ref, o_ref):
    """Single-shot tile: full K resident, no accumulator scratch."""
    acc = lax.dot_general(
        x_ref[...], w_ref[...], _CONTRACT, preferred_element_type=jnp.float32
    )
    o_ref[...] = (acc + b_ref[...].astype(jnp.float32)).astype(o_ref.dtype)


def _linear_kernel_acc(x_ref, w_ref, b_ref, o_ref, acc_ref):
    """K-tiled reduction with f32 VMEM accumulator resident across the K axis."""
    k = pl.program_id(2)

    @pl.when(k == 0)
    def _init():
        acc_ref[...] = jnp.zeros_like(acc_ref)

    acc_ref[...] += lax.dot_general(
        x_ref[...], w_ref[...], _CONTRACT, preferred_element_type=jnp.float32
    )

    @pl.when(k == pl.num_programs(2) - 1)
    def _finalize():
        out = acc_ref[...] + b_ref[...].astype(jnp.float32)
        o_ref[...] = out.astype(o_ref.dtype)


def _round_up(x, m):
    return ((x + m - 1) // m) * m


def _sublane_base(dtype):
    # packing factor of the sublane axis for this dtype
    return {4: 8, 2: 16, 1: 32}.get(jnp.dtype(dtype).itemsize, 8)


def _footprint(tm, tn, tk, k_axis, dx, dw, do):
    # double-buffered input streams + bias, double-buffered output, f32 accumulator
    fp = 2 * (tm * tk * dx + tn * tk * dw + tn * 4)
    fp += 2 * tm * tn * do
    if k_axis:
        fp += tm * tn * 4
    return fp


def text_projection(x, weight, bias, *, tm=512, tn=512, tk=512):
    """y = x @ weight.T + bias, matching torch.nn.Linear.

    x:      [..., K]
    weight: [N, K]   (PyTorch Linear layout: [out_features, in_features])
    bias:   [N]
    """
    orig_shape = x.shape
    K = orig_shape[-1]
    M = int(math.prod(orig_shape[:-1])) if len(orig_shape) > 1 else 1
    N, Kw = weight.shape
    assert Kw == K, (weight.shape, K)
    assert bias.shape == (N,), bias.shape

    out_dtype = x.dtype
    dx = jnp.dtype(x.dtype).itemsize
    dw = jnp.dtype(weight.dtype).itemsize
    do = jnp.dtype(out_dtype).itemsize
    m_base = _sublane_base(x.dtype)

    x2 = x.reshape(M, K)

    # ---- tile selection ------------------------------------------------------
    k_axis = K > _SMALL_K

    tm = _round_up(min(tm, _round_up(M, m_base)), m_base)
    tn = _round_up(min(tn, _round_up(N, 128)), 128)
    if k_axis:
        tk = _round_up(min(tk, K), 256)
    else:
        tk = _round_up(K, 128)          # full (padded) K resident per tile

    # shrink to an explicit VMEM budget (safe for v7x 64 MiB / v5e 16 MiB-scoped)
    while _footprint(tm, tn, tk, k_axis, dx, dw, do) > _VMEM_BUDGET:
        if tn >= 256 and tn >= tm:
            tn = _round_up(tn // 2, 128)
        elif tm >= 2 * m_base:
            tm = _round_up(tm // 2, m_base)
        elif k_axis and tk >= 256:
            tk = _round_up(tk // 2, 128)
        else:
            break

    M_pad = _round_up(M, tm)
    N_pad = _round_up(N, tn)
    K_pad = _round_up(K, tk) if k_axis else tk

    # keep >=2 programs on a parallel axis so multi-TC chips (v7x) use both cores
    if M_pad // tm == 1 and N_pad // tn == 1:
        if M >= 2 * m_base:
            tm = _round_up(pl.cdiv(M, 2), m_base)
            M_pad = _round_up(M, tm)
        elif N > 128:
            tn = _round_up(pl.cdiv(N, 2), 128)
            N_pad = _round_up(N, tn)

    # ---- padding (zeros; zero K-padding contributes nothing to the dot) -----
    if (M_pad, K_pad) != (M, K):
        x2 = jnp.pad(x2, ((0, M_pad - M), (0, K_pad - K)))
    w2 = weight
    if (N_pad, K_pad) != (N, K):
        w2 = jnp.pad(weight, ((0, N_pad - N), (0, K_pad - K)))
    b2 = bias.reshape(1, N)
    if N_pad != N:
        b2 = jnp.pad(b2, ((0, 0), (0, N_pad - N)))

    mt, nt = M_pad // tm, N_pad // tn

    cost = pl.CostEstimate(
        flops=2 * M_pad * N_pad * K_pad,
        transcendentals=0,
        bytes_accessed=(M_pad * K_pad * dx * nt        # x re-read once per N tile
                        + N_pad * K_pad * dw * mt      # W re-read once per M tile
                        + N_pad * 4
                        + M_pad * N_pad * do),
    )
    cparams = pltpu.CompilerParams(
        dimension_semantics=("parallel", "parallel", "arbitrary")[: (3 if k_axis else 2)],
        vmem_limit_bytes=_VMEM_LIMIT_BYTES,
    )

    if not k_axis:
        grid_spec = pltpu.PrefetchScalarGridSpec(
            num_scalar_prefetch=0,
            grid=(mt, nt),
            in_specs=[
                pl.BlockSpec((tm, K_pad), lambda i, j: (i, 0)),   # x tile
                pl.BlockSpec((tn, K_pad), lambda i, j: (j, 0)),   # W tile, native [N,K]
                pl.BlockSpec((1, tn), lambda i, j: (0, j)),       # bias tile
            ],
            out_specs=pl.BlockSpec((tm, tn), lambda i, j: (i, j)),
            scratch_shapes=[],
        )
        kernel = _linear_kernel_fused
    else:
        kt = K_pad // tk
        grid_spec = pltpu.PrefetchScalarGridSpec(
            num_scalar_prefetch=0,
            grid=(mt, nt, kt),
            in_specs=[
                pl.BlockSpec((tm, tk), lambda i, j, k: (i, k)),   # x tile
                pl.BlockSpec((tn, tk), lambda i, j, k: (j, k)),   # W tile, native [N,K]
                pl.BlockSpec((1, tn), lambda i, j, k: (0, j)),    # bias tile
            ],
            out_specs=pl.BlockSpec((tm, tn), lambda i, j, k: (i, j)),
            scratch_shapes=[pltpu.VMEM((tm, tn), jnp.float32)],
        )
        kernel = _linear_kernel_acc

    out = pl.pallas_call(
        kernel,
        out_shape=jax.ShapeDtypeStruct((M_pad, N_pad), out_dtype),
        grid_spec=grid_spec,
        compiler_params=cparams,
        cost_estimate=cost,
    )(x2, w2, b2)

    out = out[:M, :N]
    return out.reshape(orig_shape[:-1] + (N,))


def _reference(x, weight, bias):
    return (
        jnp.einsum("...k,nk->...n", x.astype(jnp.float32), weight.astype(jnp.float32))
        + bias.astype(jnp.float32)
    ).astype(x.dtype)


if __name__ == "__main__":
    key = jax.random.PRNGKey(0)
    kx, kw, kb = jax.random.split(key, 3)

    # Primary test: typical text-projection shape (small M, fused-K fast path).
    batch, seq = 2, 16
    input_dim, output_dim = 512, 384

    x = jax.random.normal(kx, (batch, seq, input_dim), dtype=jnp.float32)
    weight = jax.random.normal(kw, (output_dim, input_dim), dtype=jnp.float32) * 0.02
    bias = jax.random.normal(kb, (output_dim,), dtype=jnp.float32) * 0.02

    y = text_projection(x, weight, bias)
    jax.block_until_ready(y)
    ref = _reference(x, weight, bias)
    assert y.shape == (batch, seq, output_dim), y.shape
    assert jnp.allclose(y, ref, rtol=1e-5, atol=1e-5), float(jnp.max(jnp.abs(y - ref)))

    # Secondary test: large, non-divisible K to exercise the K-tiled accumulator
    # path and zero-padding (still small overall).
    k2, n2 = 2304, 256
    x_b = jax.random.normal(kx, (4, 16, k2), dtype=jnp.float32)
    w_b = jax.random.normal(kw, (n2, k2), dtype=jnp.float32) * 0.02
    b_b = jax.random.normal(kb, (n2,), dtype=jnp.float32) * 0.02

    y_b = text_projection(x_b, w_b, b_b)
    jax.block_until_ready(y_b)
    ref_b = _reference(x_b, w_b, b_b)
    assert y_b.shape == (4, 16, n2), y_b.shape
    assert jnp.allclose(y_b, ref_b, rtol=1e-4, atol=1e-4), float(jnp.max(jnp.abs(y_b - ref_b)))

    print("KERNEL_OK")
</pallas_src>

<mosaic_0001>
module attributes {stable_mosaic.version = 11 : i64} {
  func.func @_linear_kernel_fused(%arg0: i32, %arg1: i32, %arg2: memref<16x512xf32, #tpu.memory_space<vmem>>, %arg3: memref<384x512xf32, #tpu.memory_space<vmem>>, %arg4: memref<1x384xf32, #tpu.memory_space<vmem>>, %arg5: memref<16x384xf32, #tpu.memory_space<vmem>>) attributes {dimension_semantics = [#tpu.dimension_semantics<parallel>, #tpu.dimension_semantics<parallel>], iteration_bounds = array<i64: 2, 1>, scalar_prefetch = 0 : i64, scratch_operands = 0 : i64, tpu.core_type = #tpu.core_type<tc>, window_params = [{transform_indices = @transform_0, window_bounds = array<i64: 16, 512>}, {transform_indices = @transform_1, window_bounds = array<i64: 384, 512>}, {transform_indices = @transform_2, window_bounds = array<i64: 1, 384>}, {transform_indices = @transform_3, window_bounds = array<i64: 16, 384>}]} {
    %c0 = arith.constant 0 : index
    %c0_0 = arith.constant 0 : index
    %0 = vector.load %arg2[%c0, %c0_0] : memref<16x512xf32, #tpu.memory_space<vmem>>, vector<16x512xf32>
    %c0_1 = arith.constant 0 : index
    %c0_2 = arith.constant 0 : index
    %1 = vector.load %arg3[%c0_1, %c0_2] : memref<384x512xf32, #tpu.memory_space<vmem>>, vector<384x512xf32>
    %cst = arith.constant dense<0.000000e+00> : vector<16x384xf32>
    %2 = tpu.matmul %0, %1, %cst {dimension_numbers = #tpu.dot_dimension_numbers<[1], [1], [0], [0], [0, 0, 1, 0], [], []>} : vector<16x512xf32>, vector<384x512xf32>, vector<16x384xf32> -> vector<16x384xf32>
    %c0_3 = arith.constant 0 : index
    %c0_4 = arith.constant 0 : index
    %3 = vector.load %arg4[%c0_3, %c0_4] : memref<1x384xf32, #tpu.memory_space<vmem>>, vector<1x384xf32>
    %4 = vector.broadcast %3 : vector<1x384xf32> to vector<16x384xf32>
    %5 = arith.addf %2, %4 : vector<16x384xf32>
    %c0_5 = arith.constant 0 : index
    %c0_6 = arith.constant 0 : index
    %6 = vector.load %arg5[%c0_5, %c0_6] : memref<16x384xf32, #tpu.memory_space<vmem>>, vector<16x384xf32>
    tpu.vector_store %arg5[%c0_5, %c0_6], %5 {strides = array<i32>} : memref<16x384xf32, #tpu.memory_space<vmem>>, vector<16x384xf32>,
    return
  }
  func.func @transform_0(%arg0: i32, %arg1: i32) -> (i32, i32) {
    %c0_i32 = arith.constant 0 : i32
    %c0_i32_0 = arith.constant 0 : i32
    return %arg0, %c0_i32 : i32, i32
  }
  func.func @transform_1(%arg0: i32, %arg1: i32) -> (i32, i32) {
    %c0_i32 = arith.constant 0 : i32
    %c0_i32_0 = arith.constant 0 : i32
    return %arg1, %c0_i32 : i32, i32
  }
  func.func @transform_2(%arg0: i32, %arg1: i32) -> (i32, i32) {
    %c0_i32 = arith.constant 0 : i32
    %c0_i32_0 = arith.constant 0 : i32
    return %c0_i32, %arg1 : i32, i32
  }
  func.func @transform_3(%arg0: i32, %arg1: i32) -> (i32, i32) {
    %c0_i32 = arith.constant 0 : i32
    return %arg0, %arg1 : i32, i32
  }
}

</mosaic_0001>

<llo_original>
// kernel: tpu_custom_call.1
$region0: #{tpu_custom_call.1}
  #allocation0 [shape = 'u32[]', space=smem, size = 0x4, offset = 0x4, fixed_abs, tag = 'smem constant byte address 0x4 - core index']
  #allocation1 [shape = 'u32[144,128]{1,0:T(1,128)}', space=vmem, size = 0x12000, scoped, tag = 'internal scratch']
  %s0 = inlined_call_operand.hbm [shape: f32[32,512], index: 0, kind: input, shape index: {}]
  %s1 = inlined_call_operand.hbm [shape: f32[384,512], index: 1, kind: input, shape index: {}]
  %s2 = inlined_call_operand.vmem [shape: f32[1,384], index: 2, kind: input, shape index: {}]
  %s3 = inlined_call_operand.hbm [shape: f32[32,384], index: 3, kind: output, shape index: {}]
  %s4 = sld [smem:[#allocation0]]
  $region53: #{tpu_custom_call.1} parent=0
    _
  %s6 = ssub.s32 1, %s4
  %s7 = scalar_select 0, %s6, %s4
  $region1: #{tpu_custom_call.1} parent=0
    #allocation2 [shape = 'u8[65536]{0}', space=vmem, size = 0x10000, scoped, tag = 'input window, operand 0']
    #allocation3 [shape = 's32[2]{0}', space=sflag, size = 0x8, scoped, tag = 'scoped memory for tpu_custom_call.1']
    #allocation4 [shape = 's32[2]{0}', space=sflag, size = 0x8, scoped, tag = 'scoped memory for tpu_custom_call.1']
    #allocation5 [shape = 'u8[786432]{0}', space=vmem, size = 0xc0000, scoped, tag = 'input window, operand 1, single buffered']
    #allocation6 [shape = 's32[1]{0}', space=sflag, size = 0x4, scoped, tag = 'scoped memory for tpu_custom_call.1']
    #allocation7 [shape = 'u8[49152]{0}', space=vmem, size = 0xc000, scoped, tag = 'output window, operand 0']
    %8 = vsyncpa [#allocation3], 0
    %s9 = scalar_lea.sflag [#allocation3], 1
    %10 = vsyncpa %s9, 0
    %11 = vsyncpa [#allocation6], 0
    %12 = vsyncpa [#allocation4], 0
    %s13 = scalar_lea.sflag [#allocation4], 1
    %14 = vsyncpa %s13, 0
    loop: start=0, step=1, limit=4
    $region2: #{tpu_custom_call.1} parent=1 // loop_pre_header
      _
    $region3: #{tpu_custom_call.1} parent=1 // loop_header
      %s16 = sphi 0, %s20
      %p17 = scmp.ge.s32.totalorder %s16, 4
      %s23 = sphi 0, %s35
      %s24 = sphi 0, %s31
      %s25 = sphi 0, %s23
      %s26 = sphi 0, %s24
      %s27 = sphi 0, %s25
      %s28 = sphi 0, %s26
      %s38 = sphi 0, %s40
      %s41 = sphi 0, %s38
      %s42 = sphi 0, %s41
      %s58 = sphi 0, %s42
      %s64 = sphi 0, %s66
      %s67 = sphi 0, %s64
      %s68 = sphi 0, %s67
      %s84 = sphi 0, %s68
      %s90 = sphi 0, %s92
      %s93 = sphi 0, %s90
      %s94 = sphi 0, %s93
      %s110 = sphi 0, %s94
      %s118 = sphi 0, %s120
      %s121 = sphi 0, %s118
      %s122 = sphi 0, %s121
      %s138 = sphi 0, %s122
    $region4: #{tpu_custom_call.1} parent=1 // loop_header_branch
      %19 = sbr.rel (%p17) target = $region8
    $region5: #{tpu_custom_call.1} parent=1 // loop_body
      %s21 = ssub.s32 %s16, 1
      %s22 = ssub.s32 %s16, 2
      %s29 = sadd.s32 1, %s24
      %p30 = scmp.ge.s32.totalorder %s29, 1
      %s31 = scalar_select %p30, 0, %s29
      %s32 = sadd.s32 1, %s23
      %s33 = scalar_select %p30, %s32, %s23
      %p34 = scmp.ge.s32.totalorder %s33, 2
      %s35 = scalar_select %p34, 0, %s33
      %s36 = ssub.s32 %s23, %s35
      %p37 = scmp.eq.s32.totalorder %s36, 0
      %s39 = sadd.s32 %s38, 1
      %s40 = scalar_select %p37, %s38, %s39
      %p43 = pneg %p37
      %p44 = scmp.eq.s32.totalorder %s16, 1
      %p45 = por %p43, %p44
      %p46 = scmp.ne.s32.totalorder %s38, %s41
      %p47 = scmp.eq.s32.totalorder %s16, 0
      %p48 = por %p46, %p47
      %p49 = scmp.ne.s32.totalorder %s38, %s41
      %p50 = scmp.eq.s32.totalorder %s21, 1
      %p51 = por %p49, %p50
      %p52 = scmp.ne.s32.totalorder %s41, %s42
      %p53 = scmp.eq.s32.totalorder %s21, 0
      %p54 = por %p52, %p53
      %p55 = scmp.ne.s32.totalorder %s41, %s42
      %p56 = scmp.eq.s32.totalorder %s22, 1
      %p57 = por %p55, %p56
      %p59 = scmp.ne.s32.totalorder %s42, %s58
      %p60 = scmp.eq.s32.totalorder %s22, 0
      %p61 = por %p59, %p60
      %s62 = ssub.s32 %s24, %s31
      %p63 = scmp.eq.s32.totalorder %s62, 0
      %s65 = sadd.s32 %s64, 1
      %s66 = scalar_select %p63, %s64, %s65
      %p69 = pneg %p63
      %p70 = scmp.eq.s32.totalorder %s16, 1
      %p71 = por %p69, %p70
      %p72 = scmp.ne.s32.totalorder %s64, %s67
      %p73 = scmp.eq.s32.totalorder %s16, 0
      %p74 = por %p72, %p73
      %p75 = scmp.ne.s32.totalorder %s64, %s67
      %p76 = scmp.eq.s32.totalorder %s21, 1
      %p77 = por %p75, %p76
      %p78 = scmp.ne.s32.totalorder %s67, %s68
      %p79 = scmp.eq.s32.totalorder %s21, 0
      %p80 = por %p78, %p79
      %p81 = scmp.ne.s32.totalorder %s67, %s68
      %p82 = scmp.eq.s32.totalorder %s22, 1
      %p83 = por %p81, %p82
      %p85 = scmp.ne.s32.totalorder %s68, %s84
      %p86 = scmp.eq.s32.totalorder %s22, 0
      %p87 = por %p85, %p86
      %s88 = ssub.s32 %s24, %s31
      %p89 = scmp.eq.s32.totalorder %s88, 0
      %s91 = sadd.s32 %s90, 1
      %s92 = scalar_select %p89, %s90, %s91
      %p95 = pneg %p89
      %p96 = scmp.eq.s32.totalorder %s16, 1
      %p97 = por %p95, %p96
      %p98 = scmp.ne.s32.totalorder %s90, %s93
      %p99 = scmp.eq.s32.totalorder %s16, 0
      %p100 = por %p98, %p99
      %p101 = scmp.ne.s32.totalorder %s90, %s93
      %p102 = scmp.eq.s32.totalorder %s21, 1
      %p103 = por %p101, %p102
      %p104 = scmp.ne.s32.totalorder %s93, %s94
      %p105 = scmp.eq.s32.totalorder %s21, 0
      %p106 = por %p104, %p105
      %p107 = scmp.ne.s32.totalorder %s93, %s94
      %p108 = scmp.eq.s32.totalorder %s22, 1
      %p109 = por %p107, %p108
      %p111 = scmp.ne.s32.totalorder %s94, %s110
      %p112 = scmp.eq.s32.totalorder %s22, 0
      %p113 = por %p111, %p112
      %s114 = ssub.s32 %s23, %s35
      %s115 = ssub.s32 %s24, %s31
      %s116 = sor.u32 %s114, %s115
      %p117 = scmp.eq.s32.totalorder %s116, 0
      %s119 = sadd.s32 %s118, 1
      %s120 = scalar_select %p117, %s118, %s119
      %p123 = pneg %p117
      %p124 = scmp.eq.s32.totalorder %s16, 1
      %p125 = por %p123, %p124
      %p126 = scmp.ne.s32.totalorder %s118, %s121
      %p127 = scmp.eq.s32.totalorder %s16, 0
      %p128 = por %p126, %p127
      %p129 = scmp.ne.s32.totalorder %s118, %s121
      %p130 = scmp.eq.s32.totalorder %s21, 1
      %p131 = por %p129, %p130
      %p132 = scmp.ne.s32.totalorder %s121, %s122
      %p133 = scmp.eq.s32.totalorder %s21, 0
      %p134 = por %p132, %p133
      %p135 = scmp.ne.s32.totalorder %s121, %s122
      %p136 = scmp.eq.s32.totalorder %s22, 1
      %p137 = por %p135, %p136
      %p139 = scmp.ne.s32.totalorder %s122, %s138
      %p140 = scmp.eq.s32.totalorder %s22, 0
      %p141 = por %p139, %p140
      %p142 = scmp.le.s32.totalorder 1, %s16
      %p143 = scmp.lt.s32.totalorder %s16, 3
      %p144 = pnand %p142, %p143
      %p145 = pneg %p144
      // Predicated region
      $region9: #{tpu_custom_call.1} parent=5 // pred_check
        _
      $region10: #{tpu_custom_call.1} parent=5 // pred_check_branch
        %147 = sbr.rel (%p144) target = $region12
      $region11: #{tpu_custom_call.1} parent=5 // pred_region
        %s148 = ssub.s32 %s16, 1
        // Predicated region
        $region13: #{tpu_custom_call.1} parent=11 // pred_check
          %p149 = pneg %p80
        $region14: #{tpu_custom_call.1} parent=11 // pred_check_branch
          %151 = sbr.rel (%p149) target = $region16
        $region15: #{tpu_custom_call.1} parent=11 // pred_region
          %s152 = smul.u32 48, %s26
          %s154 = ssub.s32 24576, 24576
          %155 = vsyncadd [#allocation6], %s154
          %s156 = smul.addr %s152, 4
          %s157 = smul.addr %s156, 128
          %s158 = scalar_lea.hbm %s1, %s157
          %s159 = sshll.u32 [#allocation5], 4
          %s160 = int_to_ptr.vmem [resolvable:$true] %s159
          %165 = dma.hbm_to_vmem [thread:$0]  %s158, 24576, %s160, [#allocation6], 512, 512, 32
        $region16: #{tpu_custom_call.1} parent=11 // pred_fallthru
          _
        // Predicated region
        $region17: #{tpu_custom_call.1} parent=11 // pred_check
          %p166 = pneg %p106
        $region18: #{tpu_custom_call.1} parent=11 // pred_check_branch
          %168 = sbr.rel (%p166) target = $region20
        $region19: #{tpu_custom_call.1} parent=11 // pred_region
          %s169 = smul.u32 3, %s26
          %p170 = scmp.lt.s32.totalorder %s169, 2
          %s171 = scalar_select %p170, %s169, 2
          %s172 = scalar_lea.vmem %s2, %s171
          %s173 = smul.u32 3, %s26
        $region20: #{tpu_custom_call.1} parent=11 // pred_fallthru
          _
      $region12: #{tpu_custom_call.1} parent=5 // pred_fallthru
        _
      %p174 = scmp.lt.s32.totalorder %s16, 2
      // Predicated region
      $region21: #{tpu_custom_call.1} parent=5 // pred_check
        %p175 = pneg %p174
      $region22: #{tpu_custom_call.1} parent=5 // pred_check_branch
        %177 = sbr.rel (%p175) target = $region24
      $region23: #{tpu_custom_call.1} parent=5 // pred_region
        // Predicated region
        $region25: #{tpu_custom_call.1} parent=23 // pred_check
          %p178 = pneg %p48
        $region26: #{tpu_custom_call.1} parent=23 // pred_check_branch
          %180 = sbr.rel (%p178) target = $region28
        $region27: #{tpu_custom_call.1} parent=23 // pred_region
          %s181 = sand.u32 %s38, 1
          %s182 = scalar_lea.sflag [#allocation3], %s181
          %s183 = sand.u32 %s38, 1
          %s184 = smul.addr %s183, 64
          %s185 = scalar_lea.vmem [#allocation2], %s184
          %s186 = smul.u32 2, %s23
          %s188 = ssub.s32 1024, 1024
          %189 = vsyncadd %s182, %s188
          %s190 = smul.addr %s186, 4
          %s191 = smul.addr %s190, 128
          %s192 = scalar_lea.hbm %s0, %s191
          %s193 = sshll.u32 %s185, 4
          %s194 = int_to_ptr.vmem [resolvable:$true] %s193
          %199 = dma.hbm_to_vmem [thread:$0]  %s192, 1024, %s194, %s182, 512, 512, 32
        $region28: #{tpu_custom_call.1} parent=23 // pred_fallthru
          _
      $region24: #{tpu_custom_call.1} parent=5 // pred_fallthru
        _
      %p200 = scmp.le.s32.totalorder 1, %s16
      %p201 = scmp.lt.s32.totalorder %s16, 3
      %p202 = pnand %p200, %p201
      %p203 = pneg %p202
      // Predicated region
      $region29: #{tpu_custom_call.1} parent=5 // pred_check
        _
      $region30: #{tpu_custom_call.1} parent=5 // pred_check_branch
        %205 = sbr.rel (%p202) target = $region32
      $region31: #{tpu_custom_call.1} parent=5 // pred_region
        %s206 = ssub.s32 %s16, 1
        %s207 = sand.u32 %s41, 1
        %s208 = scalar_lea.sflag [#allocation3], %s207
        %s209 = sand.u32 %s41, 1
        %s210 = smul.addr %s209, 64
        %s211 = scalar_lea.vmem [#allocation2], %s210
        // Predicated region
        $region33: #{tpu_custom_call.1} parent=31 // pred_check
          %p212 = pneg %p54
        $region34: #{tpu_custom_call.1} parent=31 // pred_check_branch
          %214 = sbr.rel (%p212) target = $region36
        $region35: #{tpu_custom_call.1} parent=31 // pred_region
          %215 = dma.done %s208, 1024
        $region36: #{tpu_custom_call.1} parent=31 // pred_fallthru
          _
        // Predicated region
        $region37: #{tpu_custom_call.1} parent=31 // pred_check
          %p216 = pneg %p80
        $region38: #{tpu_custom_call.1} parent=31 // pred_check_branch
          %218 = sbr.rel (%p216) target = $region40
        $region39: #{tpu_custom_call.1} parent=31 // pred_region
          %219 = dma.done [#allocation6], 24576
        $region40: #{tpu_custom_call.1} parent=31 // pred_fallthru
          _
        %s220 = sand.u32 %s41, 1
        %s221 = scalar_lea.sflag [#allocation3], %s220
        %s222 = sand.u32 %s41, 1
        %s223 = smul.addr %s222, 64
        %s224 = scalar_lea.vmem [#allocation2], %s223
        %p225 = pneg %p54
        %p226 = pneg %p51
        %p227 = pneg %p80
        %p228 = pneg %p77
        %s229 = smul.u32 3, %s26
        %p230 = scmp.lt.s32.totalorder %s229, 2
        %s231 = scalar_select %p230, %s229, 2
        %s232 = scalar_lea.vmem %s2, %s231
        %p233 = pneg %p106
        %p234 = pneg %p103
        %p235 = pneg %p134
        %p236 = pneg %p131
        %s237 = sand.u32 %s121, 1
        %s238 = scalar_lea.sflag [#allocation4], %s237
        %s239 = sand.u32 %s121, 1
        %s240 = smul.addr %s239, 48
        %s241 = scalar_lea.vmem [#allocation7], %s240
        %s242 = smul.u32 2, %s25
        %s243 = smul.u32 48, %s26
        %s244 = smul.u32 3, %s26
        %p245 = scmp.lt.s32.totalorder %s244, 2
        %s246 = scalar_select %p245, %s244, 2
        %s247 = scalar_lea.vmem %s2, %s246
        %s248 = smul.u32 3, %s26
        %s249 = smul.u32 2, %s25
        %s250 = smul.u32 3, %s26
        %v251 = vld [vmem:[%s211] sm:$0xff]
        %v252 = vld [vmem:[%s211 + $0x8] sm:$0xff]
        %v253 = vld [vmem:[%s211 + $0x10] sm:$0xff]
        %v254 = vld [vmem:[%s211 + $0x18] sm:$0xff]
        %v255 = vld [vmem:[%s211 + $0x20] sm:$0xff]
        %v256 = vld [vmem:[%s211 + $0x28] sm:$0xff]
        %v257 = vld [vmem:[%s211 + $0x30] sm:$0xff]
        %v258 = vld [vmem:[%s211 + $0x38] sm:$0xff]
        %v259 = vld [vmem:[#allocation5] sm:$0xff]
        %v260 = vld [vmem:[#allocation5 + $0x8] sm:$0xff]
        %v261 = vld [vmem:[#allocation5 + $0x10] sm:$0xff]
        %v262 = vld [vmem:[#allocation5 + $0x18] sm:$0xff]
        %v263 = vld [vmem:[#allocation5 + $0x20] sm:$0xff]
        %v264 = vld [vmem:[#allocation5 + $0x28] sm:$0xff]
        %v265 = vld [vmem:[#allocation5 + $0x30] sm:$0xff]
        %v266 = vld [vmem:[#allocation5 + $0x38] sm:$0xff]
        %v267 = vld [vmem:[#allocation5 + $0x40] sm:$0xff]
        %v268 = vld [vmem:[#allocation5 + $0x48] sm:$0xff]
        %v269 = vld [vmem:[#allocation5 + $0x50] sm:$0xff]
        %v270 = vld [vmem:[#allocation5 + $0x58] sm:$0xff]
        %v271 = vld [vmem:[#allocation5 + $0x60] sm:$0xff]
        %v272 = vld [vmem:[#allocation5 + $0x68] sm:$0xff]
        %v273 = vld [vmem:[#allocation5 + $0x70] sm:$0xff]
        %v274 = vld [vmem:[#allocation5 + $0x78] sm:$0xff]
        %v275 = vld [vmem:[#allocation5 + $0x80] sm:$0xff]
        %v276 = vld [vmem:[#allocation5 + $0x88] sm:$0xff]
        %v277 = vld [vmem:[#allocation5 + $0x90] sm:$0xff]
        %v278 = vld [vmem:[#allocation5 + $0x98] sm:$0xff]
        %v279 = vld [vmem:[#allocation5 + $0xa0] sm:$0xff]
        %v280 = vld [vmem:[#allocation5 + $0xa8] sm:$0xff]
        %v281 = vld [vmem:[#allocation5 + $0xb0] sm:$0xff]
        %v282 = vld [vmem:[#allocation5 + $0xb8] sm:$0xff]
        %v283 = vld [vmem:[#allocation5 + $0xc0] sm:$0xff]
        %v284 = vld [vmem:[#allocation5 + $0xc8] sm:$0xff]
        %v285 = vld [vmem:[#allocation5 + $0xd0] sm:$0xff]
        %v286 = vld [vmem:[#allocation5 + $0xd8] sm:$0xff]
        %v287 = vld [vmem:[#allocation5 + $0xe0] sm:$0xff]
        %v288 = vld [vmem:[#allocation5 + $0xe8] sm:$0xff]
        %v289 = vld [vmem:[#allocation5 + $0xf0] sm:$0xff]
        %v290 = vld [vmem:[#allocation5 + $0xf8] sm:$0xff]
        %v291 = vld [vmem:[#allocation5 + $0x100] sm:$0xff]
        %v292 = vld [vmem:[#allocation5 + $0x108] sm:$0xff]
        %v293 = vld [vmem:[#allocation5 + $0x110] sm:$0xff]
        %v294 = vld [vmem:[#allocation5 + $0x118] sm:$0xff]
        %v295 = vld [vmem:[#allocation5 + $0x120] sm:$0xff]
        %v296 = vld [vmem:[#allocation5 + $0x128] sm:$0xff]
        %v297 = vld [vmem:[#allocation5 + $0x130] sm:$0xff]
        %v298 = vld [vmem:[#allocation5 + $0x138] sm:$0xff]
        %v299 = vld [vmem:[#allocation5 + $0x140] sm:$0xff]
        %v300 = vld [vmem:[#allocation5 + $0x148] sm:$0xff]
        %v301 = vld [vmem:[#allocation5 + $0x150] sm:$0xff]
        %v302 = vld [vmem:[#allocation5 + $0x158] sm:$0xff]
        %v303 = vld [vmem:[#allocation5 + $0x160] sm:$0xff]
        %v304 = vld [vmem:[#allocation5 + $0x168] sm:$0xff]
        %v305 = vld [vmem:[#allocation5 + $0x170] sm:$0xff]
        %v306 = vld [vmem:[#allocation5 + $0x178] sm:$0xff]
        %v307 = vld [vmem:[#allocation5 + $0x180] sm:$0xff]
        %v308 = vld [vmem:[#allocation5 + $0x188] sm:$0xff]
        %v309 = vld [vmem:[#allocation5 + $0x190] sm:$0xff]
        %v310 = vld [vmem:[#allocation5 + $0x198] sm:$0xff]
        %v311 = vld [vmem:[#allocation5 + $0x1a0] sm:$0xff]
        %v312 = vld [vmem:[#allocation5 + $0x1a8] sm:$0xff]
        %v313 = vld [vmem:[#allocation5 + $0x1b0] sm:$0xff]
        %v314 = vld [vmem:[#allocation5 + $0x1b8] sm:$0xff]
        %v315 = vld [vmem:[#allocation5 + $0x1c0] sm:$0xff]
        %v316 = vld [vmem:[#allocation5 + $0x1c8] sm:$0xff]
        %v317 = vld [vmem:[#allocation5 + $0x1d0] sm:$0xff]
        %v318 = vld [vmem:[#allocation5 + $0x1d8] sm:$0xff]
        %v319 = vld [vmem:[#allocation5 + $0x1e0] sm:$0xff]
        %v320 = vld [vmem:[#allocation5 + $0x1e8] sm:$0xff]
        %v321 = vld [vmem:[#allocation5 + $0x1f0] sm:$0xff]
        %v322 = vld [vmem:[#allocation5 + $0x1f8] sm:$0xff]
        %v323 = vld [vmem:[#allocation5 + $0x200] sm:$0xff]
        %v324 = vld [vmem:[#allocation5 + $0x208] sm:$0xff]
        %v325 = vld [vmem:[#allocation5 + $0x210] sm:$0xff]
        %v326 = vld [vmem:[#allocation5 + $0x218] sm:$0xff]
        %v327 = vld [vmem:[#allocation5 + $0x220] sm:$0xff]
        %v328 = vld [vmem:[#allocation5 + $0x228] sm:$0xff]
        %v329 = vld [vmem:[#allocation5 + $0x230] sm:$0xff]
        %v330 = vld [vmem:[#allocation5 + $0x238] sm:$0xff]
        %v331 = vld [vmem:[#allocation5 + $0x240] sm:$0xff]
        %v332 = vld [vmem:[#allocation5 + $0x248] sm:$0xff]
        %v333 = vld [vmem:[#allocation5 + $0x250] sm:$0xff]
        %v334 = vld [vmem:[#allocation5 + $0x258] sm:$0xff]
        %v335 = vld [vmem:[#allocation5 + $0x260] sm:$0xff]
        %v336 = vld [vmem:[#allocation5 + $0x268] sm:$0xff]
        %v337 = vld [vmem:[#allocation5 + $0x270] sm:$0xff]
        %v338 = vld [vmem:[#allocation5 + $0x278] sm:$0xff]
        %v339 = vld [vmem:[#allocation5 + $0x280] sm:$0xff]
        %v340 = vld [vmem:[#allocation5 + $0x288] sm:$0xff]
        %v341 = vld [vmem:[#allocation5 + $0x290] sm:$0xff]
        %v342 = vld [vmem:[#allocation5 + $0x298] sm:$0xff]
        %v343 = vld [vmem:[#allocation5 + $0x2a0] sm:$0xff]
        %v344 = vld [vmem:[#allocation5 + $0x2a8] sm:$0xff]
        %v345 = vld [vmem:[#allocation5 + $0x2b0] sm:$0xff]
        %v346 = vld [vmem:[#allocation5 + $0x2b8] sm:$0xff]
        %v347 = vld [vmem:[#allocation5 + $0x2c0] sm:$0xff]
        %v348 = vld [vmem:[#allocation5 + $0x2c8] sm:$0xff]
        %v349 = vld [vmem:[#allocation5 + $0x2d0] sm:$0xff]
        %v350 = vld [vmem:[#allocation5 + $0x2d8] sm:$0xff]
        %v351 = vld [vmem:[#allocation5 + $0x2e0] sm:$0xff]
        %v352 = vld [vmem:[#allocation5 + $0x2e8] sm:$0xff]
        %v353 = vld [vmem:[#allocation5 + $0x2f0] sm:$0xff]
        %v354 = vld [vmem:[#allocation5 + $0x2f8] sm:$0xff]
        %v355 = vld [vmem:[#allocation5 + $0x300] sm:$0xff]
        %v356 = vld [vmem:[#allocation5 + $0x308] sm:$0xff]
        %v357 = vld [vmem:[#allocation5 + $0x310] sm:$0xff]
        %v358 = vld [vmem:[#allocation5 + $0x318] sm:$0xff]
        %v359 = vld [vmem:[#allocation5 + $0x320] sm:$0xff]
        %v360 = vld [vmem:[#allocation5 + $0x328] sm:$0xff]
        %v361 = vld [vmem:[#allocation5 + $0x330] sm:$0xff]
        %v362 = vld [vmem:[#allocation5 + $0x338] sm:$0xff]
        %v363 = vld [vmem:[#allocation5 + $0x340] sm:$0xff]
        %v364 = vld [vmem:[#allocation5 + $0x348] sm:$0xff]
        %v365 = vld [vmem:[#allocation5 + $0x350] sm:$0xff]
        %v366 = vld [vmem:[#allocation5 + $0x358] sm:$0xff]
        %v367 = vld [vmem:[#allocation5 + $0x360] sm:$0xff]
        %v368 = vld [vmem:[#allocation5 + $0x368] sm:$0xff]
        %v369 = vld [vmem:[#allocation5 + $0x370] sm:$0xff]
        %v370 = vld [vmem:[#allocation5 + $0x378] sm:$0xff]
        %v371 = vld [vmem:[#allocation5 + $0x380] sm:$0xff]
        %v372 = vld [vmem:[#allocation5 + $0x388] sm:$0xff]
        %v373 = vld [vmem:[#allocation5 + $0x390] sm:$0xff]
        %v374 = vld [vmem:[#allocation5 + $0x398] sm:$0xff]
        %v375 = vld [vmem:[#allocation5 + $0x3a0] sm:$0xff]
        %v376 = vld [vmem:[#allocation5 + $0x3a8] sm:$0xff]
        %v377 = vld [vmem:[#allocation5 + $0x3b0] sm:$0xff]
        %v378 = vld [vmem:[#allocation5 + $0x3b8] sm:$0xff]
        %v379 = vld [vmem:[#allocation5 + $0x3c0] sm:$0xff]
        %v380 = vld [vmem:[#allocation5 + $0x3c8] sm:$0xff]
        %v381 = vld [vmem:[#allocation5 + $0x3d0] sm:$0xff]
        %v382 = vld [vmem:[#allocation5 + $0x3d8] sm:$0xff]
        %v383 = vld [vmem:[#allocation5 + $0x3e0] sm:$0xff]
        %v384 = vld [vmem:[#allocation5 + $0x3e8] sm:$0xff]
        %v385 = vld [vmem:[#allocation5 + $0x3f0] sm:$0xff]
        %v386 = vld [vmem:[#allocation5 + $0x3f8] sm:$0xff]
        %v387 = vld [vmem:[#allocation5 + $0x400] sm:$0xff]
        %v388 = vld [vmem:[#allocation5 + $0x408] sm:$0xff]
        %v389 = vld [vmem:[#allocation5 + $0x410] sm:$0xff]
        %v390 = vld [vmem:[#allocation5 + $0x418] sm:$0xff]
        %v391 = vld [vmem:[#allocation5 + $0x420] sm:$0xff]
        %v392 = vld [vmem:[#allocation5 + $0x428] sm:$0xff]
        %v393 = vld [vmem:[#allocation5 + $0x430] sm:$0xff]
        %v394 = vld [vmem:[#allocation5 + $0x438] sm:$0xff]
        %v395 = vld [vmem:[#allocation5 + $0x440] sm:$0xff]
        %v396 = vld [vmem:[#allocation5 + $0x448] sm:$0xff]
        %v397 = vld [vmem:[#allocation5 + $0x450] sm:$0xff]
        %v398 = vld [vmem:[#allocation5 + $0x458] sm:$0xff]
        %v399 = vld [vmem:[#allocation5 + $0x460] sm:$0xff]
        %v400 = vld [vmem:[#allocation5 + $0x468] sm:$0xff]
        %v401 = vld [vmem:[#allocation5 + $0x470] sm:$0xff]
        %v402 = vld [vmem:[#allocation5 + $0x478] sm:$0xff]
        %v403 = vld [vmem:[#allocation5 + $0x480] sm:$0xff]
        %v404 = vld [vmem:[#allocation5 + $0x488] sm:$0xff]
        %v405 = vld [vmem:[#allocation5 + $0x490] sm:$0xff]
        %v406 = vld [vmem:[#allocation5 + $0x498] sm:$0xff]
        %v407 = vld [vmem:[#allocation5 + $0x4a0] sm:$0xff]
        %v408 = vld [vmem:[#allocation5 + $0x4a8] sm:$0xff]
        %v409 = vld [vmem:[#allocation5 + $0x4b0] sm:$0xff]
        %v410 = vld [vmem:[#allocation5 + $0x4b8] sm:$0xff]
        %v411 = vld [vmem:[#allocation5 + $0x4c0] sm:$0xff]
        %v412 = vld [vmem:[#allocation5 + $0x4c8] sm:$0xff]
        %v413 = vld [vmem:[#allocation5 + $0x4d0] sm:$0xff]
        %v414 = vld [vmem:[#allocation5 + $0x4d8] sm:$0xff]
        %v415 = vld [vmem:[#allocation5 + $0x4e0] sm:$0xff]
        %v416 = vld [vmem:[#allocation5 + $0x4e8] sm:$0xff]
        %v417 = vld [vmem:[#allocation5 + $0x4f0] sm:$0xff]
        %v418 = vld [vmem:[#allocation5 + $0x4f8] sm:$0xff]
        %v419 = vld [vmem:[#allocation5 + $0x500] sm:$0xff]
        %v420 = vld [vmem:[#allocation5 + $0x508] sm:$0xff]
        %v421 = vld [vmem:[#allocation5 + $0x510] sm:$0xff]
        %v422 = vld [vmem:[#allocation5 + $0x518] sm:$0xff]
        %v423 = vld [vmem:[#allocation5 + $0x520] sm:$0xff]
        %v424 = vld [vmem:[#allocation5 + $0x528] sm:$0xff]
        %v425 = vld [vmem:[#allocation5 + $0x530] sm:$0xff]
        %v426 = vld [vmem:[#allocation5 + $0x538] sm:$0xff]
        %v427 = vld [vmem:[#allocation5 + $0x540] sm:$0xff]
        %v428 = vld [vmem:[#allocation5 + $0x548] sm:$0xff]
        %v429 = vld [vmem:[#allocation5 + $0x550] sm:$0xff]
        %v430 = vld [vmem:[#allocation5 + $0x558] sm:$0xff]
        %v431 = vld [vmem:[#allocation5 + $0x560] sm:$0xff]
        %v432 = vld [vmem:[#allocation5 + $0x568] sm:$0xff]
        %v433 = vld [vmem:[#allocation5 + $0x570] sm:$0xff]
        %v434 = vld [vmem:[#allocation5 + $0x578] sm:$0xff]
        %v435 = vld [vmem:[#allocation5 + $0x580] sm:$0xff]
        %v436 = vld [vmem:[#allocation5 + $0x588] sm:$0xff]
        %v437 = vld [vmem:[#allocation5 + $0x590] sm:$0xff]
        %v438 = vld [vmem:[#allocation5 + $0x598] sm:$0xff]
        %v439 = vld [vmem:[#allocation5 + $0x5a0] sm:$0xff]
        %v440 = vld [vmem:[#allocation5 + $0x5a8] sm:$0xff]
        %v441 = vld [vmem:[#allocation5 + $0x5b0] sm:$0xff]
        %v442 = vld [vmem:[#allocation5 + $0x5b8] sm:$0xff]
        %v443 = vld [vmem:[#allocation5 + $0x5c0] sm:$0xff]
        %v444 = vld [vmem:[#allocation5 + $0x5c8] sm:$0xff]
        %v445 = vld [vmem:[#allocation5 + $0x5d0] sm:$0xff]
        %v446 = vld [vmem:[#allocation5 + $0x5d8] sm:$0xff]
        %v447 = vld [vmem:[#allocation5 + $0x5e0] sm:$0xff]
        %v448 = vld [vmem:[#allocation5 + $0x5e8] sm:$0xff]
        %v449 = vld [vmem:[#allocation5 + $0x5f0] sm:$0xff]
        %v450 = vld [vmem:[#allocation5 + $0x5f8] sm:$0xff]
        %v451 = vld [vmem:[%s247] sm:$0x7]
        %v453 = vlaneseq
        %v454 = vshrl.u32 %v453, 7
        %v455 = vsub.s32 0, %v454
        %v456 = vrot.slane %v451, %v455
        %v457 = vlaneseq
        %v458 = vshrl.u32 %v457, 7
        %v459 = vsub.s32 1, %v458
        %v460 = vrot.slane %v451, %v459
        %v461 = vlaneseq
        %v462 = vshrl.u32 %v461, 7
        %v463 = vsub.s32 2, %v462
        %v464 = vrot.slane %v451, %v463
        %468 = vmatprep.subr.mxu0 %v260
        %469 = vmatpush1.xpose.msra.mxu0 %v259
        %470 = vmatprep.subr.mxu0 %v264
        %471 = vmatpush1.xpose.msra.mxu0 %v263
        %472 = vmatprep.subr.mxu0 %v268
        %473 = vmatpush1.xpose.msra.mxu0 %v267
        %474 = vmatprep.subr.mxu0 %v272
        %475 = vmatpush1.xpose.msra.mxu0 %v271
        %476 = vmatprep.subr.mxu0 %v276
        %477 = vmatpush1.xpose.msra.mxu0 %v275
        %478 = vmatprep.subr.mxu0 %v280
        %479 = vmatpush1.xpose.msra.mxu0 %v279
        %480 = vmatprep.subr.mxu0 %v284
        %481 = vmatpush1.xpose.msra.mxu0 %v283
        %482 = vmatprep.subr.mxu0 %v288
        %483 = vmatpush1.xpose.msra.mxu0 %v287
        %484 = vmatprep.subr.mxu0 %v292
        %485 = vmatpush1.xpose.msra.mxu0 %v291
        %486 = vmatprep.subr.mxu0 %v296
        %487 = vmatpush1.xpose.msra.mxu0 %v295
        %488 = vmatprep.subr.mxu0 %v300
        %489 = vmatpush1.xpose.msra.mxu0 %v299
        %490 = vmatprep.subr.mxu0 %v304
        %491 = vmatpush1.xpose.msra.mxu0 %v303
        %492 = vmatprep.subr.mxu0 %v308
        %493 = vmatpush1.xpose.msra.mxu0 %v307
        %494 = vmatprep.subr.mxu0 %v312
        %495 = vmatpush1.xpose.msra.mxu0 %v311
        %496 = vmatprep.subr.mxu0 %v316
        %497 = vmatpush1.xpose.msra.mxu0 %v315
        %498 = vmatprep.subr.mxu0 %v320
        %499 = vmatpush1.xpose.msra.mxu0 %v319
        %500 = vmatprep.subr.mxu0 %v324
        %501 = vmatpush1.xpose.msra.mxu0 %v323
        %502 = vmatprep.subr.mxu0 %v328
        %503 = vmatpush1.xpose.msra.mxu0 %v327
        %504 = vmatprep.subr.mxu0 %v332
        %505 = vmatpush1.xpose.msra.mxu0 %v331
        %506 = vmatprep.subr.mxu0 %v336
        %507 = vmatpush1.xpose.msra.mxu0 %v335
        %508 = vmatprep.subr.mxu0 %v340
        %509 = vmatpush1.xpose.msra.mxu0 %v339
        %510 = vmatprep.subr.mxu0 %v344
        %511 = vmatpush1.xpose.msra.mxu0 %v343
        %512 = vmatprep.subr.mxu0 %v348
        %513 = vmatpush1.xpose.msra.mxu0 %v347
        %514 = vmatprep.subr.mxu0 %v352
        %515 = vmatpush1.xpose.msra.mxu0 %v351
        %516 = vmatprep.subr.mxu0 %v356
        %517 = vmatpush1.xpose.msra.mxu0 %v355
        %518 = vmatprep.subr.mxu0 %v360
        %519 = vmatpush1.xpose.msra.mxu0 %v359
        %520 = vmatprep.subr.mxu0 %v364
        %521 = vmatpush1.xpose.msra.mxu0 %v363
        %522 = vmatprep.subr.mxu0 %v368
        %523 = vmatpush1.xpose.msra.mxu0 %v367
        %524 = vmatprep.subr.mxu0 %v372
        %525 = vmatpush1.xpose.msra.mxu0 %v371
        %526 = vmatprep.subr.mxu0 %v376
        %527 = vmatpush1.xpose.msra.mxu0 %v375
        %528 = vmatprep.subr.mxu0 %v380
        %529 = vmatpush1.xpose.msra.mxu0 %v379
        %530 = vmatprep.subr.mxu0 %v384
        %531 = vmatpush1.xpose.msra.mxu0 %v383
        %532 = vmatprep.mubr.f32.mxu0 %v252
        %533 = vmatmul.mubr.f32.gmra.mrb[0].mxu0 %v251
        %v534 = vpop.f32.mrb[0].mxu0
        %v535 = vadd.f32 %v456, %v534
        %v536 = vpop.f32.mrb[0].mxu0
        %v537 = vadd.f32 %v460, %v536
        %538 = vmatprep.mubr.f32.mxu0 %v256
        %539 = vmatmul.mubr.f32.gmra.mrb[0].mxu0 %v255
        %v540 = vpop.f32.mrb[0].mxu0
        %v541 = vadd.f32 %v456, %v540
        %v542 = vpop.f32.mrb[0].mxu0
        %v543 = vadd.f32 %v460, %v542
        %544 = vdwg.mxu0
        %545 = vmatprep.subr.mxu0 %v262
        %546 = vmatpush1.xpose.msra.mxu0 %v261
        %547 = vmatprep.subr.mxu0 %v266
        %548 = vmatpush1.xpose.msra.mxu0 %v265
        %549 = vmatprep.subr.mxu0 %v270
        %550 = vmatpush1.xpose.msra.mxu0 %v269
        %551 = vmatprep.subr.mxu0 %v274
        %552 = vmatpush1.xpose.msra.mxu0 %v273
        %553 = vmatprep.subr.mxu0 %v278
        %554 = vmatpush1.xpose.msra.mxu0 %v277
        %555 = vmatprep.subr.mxu0 %v282
        %556 = vmatpush1.xpose.msra.mxu0 %v281
        %557 = vmatprep.subr.mxu0 %v286
        %558 = vmatpush1.xpose.msra.mxu0 %v285
        %559 = vmatprep.subr.mxu0 %v290
        %560 = vmatpush1.xpose.msra.mxu0 %v289
        %561 = vmatprep.subr.mxu0 %v294
        %562 = vmatpush1.xpose.msra.mxu0 %v293
        %563 = vmatprep.subr.mxu0 %v298
        %564 = vmatpush1.xpose.msra.mxu0 %v297
        %565 = vmatprep.subr.mxu0 %v302
        %566 = vmatpush1.xpose.msra.mxu0 %v301
        %567 = vmatprep.subr.mxu0 %v306
        %568 = vmatpush1.xpose.msra.mxu0 %v305
        %569 = vmatprep.subr.mxu0 %v310
        %570 = vmatpush1.xpose.msra.mxu0 %v309
        %571 = vmatprep.subr.mxu0 %v314
        %572 = vmatpush1.xpose.msra.mxu0 %v313
        %573 = vmatprep.subr.mxu0 %v318
        %574 = vmatpush1.xpose.msra.mxu0 %v317
        %575 = vmatprep.subr.mxu0 %v322
        %576 = vmatpush1.xpose.msra.mxu0 %v321
        %577 = vmatprep.subr.mxu0 %v326
        %578 = vmatpush1.xpose.msra.mxu0 %v325
        %579 = vmatprep.subr.mxu0 %v330
        %580 = vmatpush1.xpose.msra.mxu0 %v329
        %581 = vmatprep.subr.mxu0 %v334
        %582 = vmatpush1.xpose.msra.mxu0 %v333
        %583 = vmatprep.subr.mxu0 %v338
        %584 = vmatpush1.xpose.msra.mxu0 %v337
        %585 = vmatprep.subr.mxu0 %v342
        %586 = vmatpush1.xpose.msra.mxu0 %v341
        %587 = vmatprep.subr.mxu0 %v346
        %588 = vmatpush1.xpose.msra.mxu0 %v345
        %589 = vmatprep.subr.mxu0 %v350
        %590 = vmatpush1.xpose.msra.mxu0 %v349
        %591 = vmatprep.subr.mxu0 %v354
        %592 = vmatpush1.xpose.msra.mxu0 %v353
        %593 = vmatprep.subr.mxu0 %v358
        %594 = vmatpush1.xpose.msra.mxu0 %v357
        %595 = vmatprep.subr.mxu0 %v362
        %596 = vmatpush1.xpose.msra.mxu0 %v361
        %597 = vmatprep.subr.mxu0 %v366
        %598 = vmatpush1.xpose.msra.mxu0 %v365
        %599 = vmatprep.subr.mxu0 %v370
        %600 = vmatpush1.xpose.msra.mxu0 %v369
        %601 = vmatprep.subr.mxu0 %v374
        %602 = vmatpush1.xpose.msra.mxu0 %v373
        %603 = vmatprep.subr.mxu0 %v378
        %604 = vmatpush1.xpose.msra.mxu0 %v377
        %605 = vmatprep.subr.mxu0 %v382
        %606 = vmatpush1.xpose.msra.mxu0 %v381
        %607 = vmatprep.subr.mxu0 %v386
        %608 = vmatpush1.xpose.msra.mxu0 %v385
        %609 = vmatprep.mubr.f32.mxu0 %v254
        %610 = vmatmul.mubr.f32.gmra.mrb[0].mxu0 %v253
        %v611 = vpop.f32.mrb[0].mxu0
        %v612 = vadd.f32 %v535, %v611
        %v613 = vpop.f32.mrb[0].mxu0
        %v614 = vadd.f32 %v537, %v613
        %615 = vmatprep.mubr.f32.mxu0 %v258
        %616 = vmatmul.mubr.f32.gmra.mrb[0].mxu0 %v257
        %v617 = vpop.f32.mrb[0].mxu0
        %v618 = vadd.f32 %v541, %v617
        %v619 = vpop.f32.mrb[0].mxu0
        %v620 = vadd.f32 %v543, %v619
        %621 = vdwg.mxu0
        %622 = vmatprep.subr.mxu0 %v388
        %623 = vmatpush1.xpose.msra.mxu0 %v387
        %624 = vmatprep.subr.mxu0 %v392
        %625 = vmatpush1.xpose.msra.mxu0 %v391
        %626 = vmatprep.subr.mxu0 %v396
        %627 = vmatpush1.xpose.msra.mxu0 %v395
        %628 = vmatprep.subr.mxu0 %v400
        %629 = vmatpush1.xpose.msra.mxu0 %v399
        %630 = vmatprep.subr.mxu0 %v404
        %631 = vmatpush1.xpose.msra.mxu0 %v403
        %632 = vmatprep.subr.mxu0 %v408
        %633 = vmatpush1.xpose.msra.mxu0 %v407
        %634 = vmatprep.subr.mxu0 %v412
        %635 = vmatpush1.xpose.msra.mxu0 %v411
        %636 = vmatprep.subr.mxu0 %v416
        %637 = vmatpush1.xpose.msra.mxu0 %v415
        %638 = vmatprep.subr.mxu0 %v420
        %639 = vmatpush1.xpose.msra.mxu0 %v419
        %640 = vmatprep.subr.mxu0 %v424
        %641 = vmatpush1.xpose.msra.mxu0 %v423
        %642 = vmatprep.subr.mxu0 %v428
        %643 = vmatpush1.xpose.msra.mxu0 %v427
        %644 = vmatprep.subr.mxu0 %v432
        %645 = vmatpush1.xpose.msra.mxu0 %v431
        %646 = vmatprep.subr.mxu0 %v436
        %647 = vmatpush1.xpose.msra.mxu0 %v435
        %648 = vmatprep.subr.mxu0 %v440
        %649 = vmatpush1.xpose.msra.mxu0 %v439
        %650 = vmatprep.subr.mxu0 %v444
        %651 = vmatpush1.xpose.msra.mxu0 %v443
        %652 = vmatprep.subr.mxu0 %v448
        %653 = vmatpush1.xpose.msra.mxu0 %v447
        %654 = vmatprep.subr.mxu0 0.0
        %655 = vmatpush1.xpose.msra.mxu0 0.0
        %656 = vmatprep.subr.mxu0 0.0
        %657 = vmatpush1.xpose.msra.mxu0 0.0
        %658 = vmatprep.subr.mxu0 0.0
        %659 = vmatpush1.xpose.msra.mxu0 0.0
        %660 = vmatprep.subr.mxu0 0.0
        %661 = vmatpush1.xpose.msra.mxu0 0.0
        %662 = vmatprep.subr.mxu0 0.0
        %663 = vmatpush1.xpose.msra.mxu0 0.0
        %664 = vmatprep.subr.mxu0 0.0
        %665 = vmatpush1.xpose.msra.mxu0 0.0
        %666 = vmatprep.subr.mxu0 0.0
        %667 = vmatpush1.xpose.msra.mxu0 0.0
        %668 = vmatprep.subr.mxu0 0.0
        %669 = vmatpush1.xpose.msra.mxu0 0.0
        %670 = vmatprep.subr.mxu0 0.0
        %671 = vmatpush1.xpose.msra.mxu0 0.0
        %672 = vmatprep.subr.mxu0 0.0
        %673 = vmatpush1.xpose.msra.mxu0 0.0
        %674 = vmatprep.subr.mxu0 0.0
        %675 = vmatpush1.xpose.msra.mxu0 0.0
        %676 = vmatprep.subr.mxu0 0.0
        %677 = vmatpush1.xpose.msra.mxu0 0.0
        %678 = vmatprep.subr.mxu0 0.0
        %679 = vmatpush1.xpose.msra.mxu0 0.0
        %680 = vmatprep.subr.mxu0 0.0
        %681 = vmatpush1.xpose.msra.mxu0 0.0
        %682 = vmatprep.subr.mxu0 0.0
        %683 = vmatpush1.xpose.msra.mxu0 0.0
        %684 = vmatprep.subr.mxu0 0.0
        %685 = vmatpush1.xpose.msra.mxu0 0.0
        %686 = vmatprep.mubr.f32.mxu0 %v252
        %687 = vmatmul.mubr.f32.gmra.mrb[0].mxu0 %v251
        %v688 = vpop.f32.mrb[0].mxu0
        %v689 = vadd.f32 %v464, %v688
        %v690 = vpop.f32.mrb[0].mxu0
        %691 = vmatprep.mubr.f32.mxu0 %v256
        %692 = vmatmul.mubr.f32.gmra.mrb[0].mxu0 %v255
        %v693 = vpop.f32.mrb[0].mxu0
        %v694 = vadd.f32 %v464, %v693
        %v695 = vpop.f32.mrb[0].mxu0
        %696 = vdwg.mxu0
        %697 = vmatprep.subr.mxu0 %v390
        %698 = vmatpush1.xpose.msra.mxu0 %v389
        %699 = vmatprep.subr.mxu0 %v394
        %700 = vmatpush1.xpose.msra.mxu0 %v393
        %701 = vmatprep.subr.mxu0 %v398
        %702 = vmatpush1.xpose.msra.mxu0 %v397
        %703 = vmatprep.subr.mxu0 %v402
        %704 = vmatpush1.xpose.msra.mxu0 %v401
        %705 = vmatprep.subr.mxu0 %v406
        %706 = vmatpush1.xpose.msra.mxu0 %v405
        %707 = vmatprep.subr.mxu0 %v410
        %708 = vmatpush1.xpose.msra.mxu0 %v409
        %709 = vmatprep.subr.mxu0 %v414
        %710 = vmatpush1.xpose.msra.mxu0 %v413
        %711 = vmatprep.subr.mxu0 %v418
        %712 = vmatpush1.xpose.msra.mxu0 %v417
        %713 = vmatprep.subr.mxu0 %v422
        %714 = vmatpush1.xpose.msra.mxu0 %v421
        %715 = vmatprep.subr.mxu0 %v426
        %716 = vmatpush1.xpose.msra.mxu0 %v425
        %717 = vmatprep.subr.mxu0 %v430
        %718 = vmatpush1.xpose.msra.mxu0 %v429
        %719 = vmatprep.subr.mxu0 %v434
        %720 = vmatpush1.xpose.msra.mxu0 %v433
        %721 = vmatprep.subr.mxu0 %v438
        %722 = vmatpush1.xpose.msra.mxu0 %v437
        %723 = vmatprep.subr.mxu0 %v442
        %724 = vmatpush1.xpose.msra.mxu0 %v441
        %725 = vmatprep.subr.mxu0 %v446
        %726 = vmatpush1.xpose.msra.mxu0 %v445
        %727 = vmatprep.subr.mxu0 %v450
        %728 = vmatpush1.xpose.msra.mxu0 %v449
        %729 = vmatprep.subr.mxu0 0.0
        %730 = vmatpush1.xpose.msra.mxu0 0.0
        %731 = vmatprep.subr.mxu0 0.0
        %732 = vmatpush1.xpose.msra.mxu0 0.0
        %733 = vmatprep.subr.mxu0 0.0
        %734 = vmatpush1.xpose.msra.mxu0 0.0
        %735 = vmatprep.subr.mxu0 0.0
        %736 = vmatpush1.xpose.msra.mxu0 0.0
        %737 = vmatprep.subr.mxu0 0.0
        %738 = vmatpush1.xpose.msra.mxu0 0.0
        %739 = vmatprep.subr.mxu0 0.0
        %740 = vmatpush1.xpose.msra.mxu0 0.0
        %741 = vmatprep.subr.mxu0 0.0
        %742 = vmatpush1.xpose.msra.mxu0 0.0
        %743 = vmatprep.subr.mxu0 0.0
        %744 = vmatpush1.xpose.msra.mxu0 0.0
        %745 = vmatprep.subr.mxu0 0.0
        %746 = vmatpush1.xpose.msra.mxu0 0.0
        %747 = vmatprep.subr.mxu0 0.0
        %748 = vmatpush1.xpose.msra.mxu0 0.0
        %749 = vmatprep.subr.mxu0 0.0
        %750 = vmatpush1.xpose.msra.mxu0 0.0
        %751 = vmatprep.subr.mxu0 0.0
        %752 = vmatpush1.xpose.msra.mxu0 0.0
        %753 = vmatprep.subr.mxu0 0.0
        %754 = vmatpush1.xpose.msra.mxu0 0.0
        %755 = vmatprep.subr.mxu0 0.0
        %756 = vmatpush1.xpose.msra.mxu0 0.0
        %757 = vmatprep.subr.mxu0 0.0
        %758 = vmatpush1.xpose.msra.mxu0 0.0
        %759 = vmatprep.subr.mxu0 0.0
        %760 = vmatpush1.xpose.msra.mxu0 0.0
        %761 = vmatprep.mubr.f32.mxu0 %v254
        %762 = vmatmul.mubr.f32.gmra.mrb[0].mxu0 %v253
        %v763 = vpop.f32.mrb[0].mxu0
        %v764 = vadd.f32 %v689, %v763
        %v765 = vpop.f32.mrb[0].mxu0
        %766 = vmatprep.mubr.f32.mxu0 %v258
        %767 = vmatmul.mubr.f32.gmra.mrb[0].mxu0 %v257
        %v768 = vpop.f32.mrb[0].mxu0
        %v769 = vadd.f32 %v694, %v768
        %v770 = vpop.f32.mrb[0].mxu0
        %771 = vdwg.mxu0
        %772 = vst [vmem:[%s241] sm:$0xff] %v612
        %773 = vst [vmem:[%s241 + $0x8] sm:$0xff] %v614
        %774 = vst [vmem:[%s241 + $0x10] sm:$0xff] %v764
        %775 = vst [vmem:[%s241 + $0x18] sm:$0xff] %v618
        %776 = vst [vmem:[%s241 + $0x20] sm:$0xff] %v620
        %777 = vst [vmem:[%s241 + $0x28] sm:$0xff] %v769
        %s778 = sand.u32 %s121, 1
        %s779 = scalar_lea.sflag [#allocation4], %s778
        %s780 = sand.u32 %s121, 1
        %s781 = smul.addr %s780, 48
        %s782 = scalar_lea.vmem [#allocation7], %s781
        // Predicated region
        $region41: #{tpu_custom_call.1} parent=31 // pred_check
          %p783 = pneg %p131
        $region42: #{tpu_custom_call.1} parent=31 // pred_check_branch
          %785 = sbr.rel (%p783) target = $region44
        $region43: #{tpu_custom_call.1} parent=31 // pred_region
          %s786 = smul.u32 2, %s25
          %s787 = smul.u32 3, %s26
          %s789 = ssub.s32 768, 768
          %790 = vsyncadd %s779, %s789
          %s791 = smul.addr %s786, 3
          %s792 = sadd.s32 %s787, %s791
          %s793 = smul.addr %s792, 128
          %s794 = scalar_lea.hbm %s3, %s793
          %s795 = sshll.u32 %s782, 4
          %s796 = int_to_ptr.vmem [resolvable:$true] %s795
          %801 = dma.vmem_to_hbm [thread:$0]  %s796, 768, %s794, %s779, 384, 384, 24
        $region44: #{tpu_custom_call.1} parent=31 // pred_fallthru
          _
      $region32: #{tpu_custom_call.1} parent=5 // pred_fallthru
        _
      %p802 = scmp.le.s32.totalorder 2, %s16
      // Predicated region
      $region45: #{tpu_custom_call.1} parent=5 // pred_check
        %p803 = pneg %p802
      $region46: #{tpu_custom_call.1} parent=5 // pred_check_branch
        %805 = sbr.rel (%p803) target = $region48
      $region47: #{tpu_custom_call.1} parent=5 // pred_region
        %s806 = ssub.s32 %s16, 2
        // Predicated region
        $region49: #{tpu_custom_call.1} parent=47 // pred_check
          %p807 = pneg %p137
        $region50: #{tpu_custom_call.1} parent=47 // pred_check_branch
          %809 = sbr.rel (%p807) target = $region52
        $region51: #{tpu_custom_call.1} parent=47 // pred_region
          %s810 = sand.u32 %s122, 1
          %s811 = scalar_lea.sflag [#allocation4], %s810
          %s812 = sand.u32 %s122, 1
          %s813 = smul.addr %s812, 48
          %s814 = scalar_lea.vmem [#allocation7], %s813
          %815 = dma.done %s811, 768
        $region52: #{tpu_custom_call.1} parent=47 // pred_fallthru
          _
      $region48: #{tpu_custom_call.1} parent=5 // pred_fallthru
        _
    $region6: #{tpu_custom_call.1} parent=1 // loop_footer
      %s20 = sadd.s32 1, %s16
    $region7: #{tpu_custom_call.1} parent=1 // loop_footer_branch
      %15 = sbr.rel target = $region3
    $region8: #{tpu_custom_call.1} parent=1 // loop_exit
      _
    %816 = vsyncpa [#allocation3], 1
    %s817 = scalar_lea.sflag [#allocation3], 1
    %818 = vsyncpa %s817, 1
    %819 = vsyncpa [#allocation6], 1
    %820 = vsyncpa [#allocation4], 1
    %s821 = scalar_lea.sflag [#allocation4], 1
    %822 = vsyncpa %s821, 1

</llo_original>
